<compile_context>
chip_gen: v5e
topology: v5e:2x2
jax: 0.10.0
libtpu: 0.0.40
codegen_flags: <defaults>
</compile_context>

<pallas_src>
import jax
import jax.numpy as jnp
from jax.experimental import pallas as pl
from jax.experimental.pallas import tpu as pltpu

HIDDEN1 = 64
HIDDEN2 = 32
TB_MAX = 4096  # batch-tile cap: ~14 MiB VMEM (incl. double buffers) at F=16


def _round_up(x, m):
    return (x + m - 1) // m * m


def mlp_kernel(x_ref, w1_ref, b1_ref, w2_ref, b2_ref, w3_ref, b3_ref, o_ref):
    # Fused 3-layer MLP on one batch tile; all intermediates stay in VMEM/vregs.
    # Cast x to bf16 on the VPU here (hidden under the DMA) instead of a
    # separate XLA cast pass in the wrapper.
    x = x_ref[...].astype(jnp.bfloat16)                       # (TB, F)

    # Layer 1: bf16 x bf16 MXU matmul, f32 accumulate; bias/ReLU in f32.
    h1 = jnp.dot(x, w1_ref[...], preferred_element_type=jnp.float32) + b1_ref[...]
    h1 = jnp.maximum(h1, 0.0)

    # Layer 2.
    h2 = jnp.dot(h1.astype(jnp.bfloat16), w2_ref[...],
                 preferred_element_type=jnp.float32) + b2_ref[...]
    h2 = jnp.maximum(h2, 0.0)

    # Layer 3: store only the real out_dim columns (no 128-lane padding).
    logits = jnp.dot(h2.astype(jnp.bfloat16), w3_ref[...],
                     preferred_element_type=jnp.float32) + b3_ref[...]
    o_ref[...] = logits.astype(o_ref.dtype)


@jax.jit
def simple_net_forward(x, params):
    w1, b1, w2, b2, w3, b3 = params
    B, F = x.shape
    out_dim = w3.shape[1]

    # One-time bf16 cast for the (tiny, VMEM-resident) weights; biases stay in
    # the f32 accumulator dtype. No lane padding of layer 3.
    w1_bf = w1.astype(jnp.bfloat16)
    w2_bf = w2.astype(jnp.bfloat16)
    w3_bf = w3.astype(jnp.bfloat16)
    b1_f = b1.astype(jnp.float32)
    b2_f = b2.astype(jnp.float32)
    b3_f = b3.astype(jnp.float32)

    # Batch tile: multiple of 8 sublanes; aim for >=2 grid steps (so the
    # parallel batch axis can use both v7x TensorCores) but cap at TB_MAX.
    half = -(-B // 2)
    tb = min(TB_MAX, max(8, _round_up(half, 8)))
    grid = (pl.cdiv(B, tb),)  # no jnp.pad: boundary block is partial & masked

    def resident(a):
        return pl.BlockSpec(a.shape, lambda i: (0, 0))  # never re-DMA'd

    cost = pl.CostEstimate(
        flops=2 * B * (F * HIDDEN1 + HIDDEN1 * HIDDEN2 + HIDDEN2 * out_dim),
        transcendentals=0,
        bytes_accessed=(x.size * x.dtype.itemsize          # input read (f32)
                        + B * out_dim * 4                  # output write (f32)
                        + w1_bf.size * 2 + w2_bf.size * 2 + w3_bf.size * 2
                        + b1_f.size * 4 + b2_f.size * 4 + b3_f.size * 4),
    )

    out = pl.pallas_call(
        mlp_kernel,
        out_shape=jax.ShapeDtypeStruct((B, out_dim), jnp.float32),
        grid=grid,
        in_specs=[
            pl.BlockSpec((tb, F), lambda i: (i, 0)),   # batch-tiled input (f32)
            resident(w1_bf), resident(b1_f),
            resident(w2_bf), resident(b2_f),
            resident(w3_bf), resident(b3_f),
        ],
        out_specs=pl.BlockSpec((tb, out_dim), lambda i: (i, 0)),
        compiler_params=pltpu.CompilerParams(
            dimension_semantics=("parallel",),
            vmem_limit_bytes=32 << 20),
        cost_estimate=cost,
    )(x, w1_bf, b1_f, w2_bf, b2_f, w3_bf, b3_f)

    return out.astype(x.dtype)


def init_params(key, in_shape, out_shape, dtype=jnp.float32):
    """Deterministic PyTorch-style init: U(-1/sqrt(fan_in), 1/sqrt(fan_in)).

    Weights are stored [fan_in, fan_out] (transpose of nn.Linear.weight) so the
    forward pass is x @ W + b; biases are [1, fan_out] for 2D broadcasting.
    """
    dims = [(in_shape, HIDDEN1), (HIDDEN1, HIDDEN2), (HIDDEN2, out_shape)]
    params = []
    for i, (fan_in, fan_out) in enumerate(dims):
        kw, kb = jax.random.split(jax.random.fold_in(key, i))
        bound = 1.0 / (fan_in ** 0.5)
        w = jax.random.uniform(kw, (fan_in, fan_out), dtype, -bound, bound)
        b = jax.random.uniform(kb, (1, fan_out), dtype, -bound, bound)
        params.extend([w, b])
    return tuple(params)


def reference_forward_bf16(x, params):
    """Same math as the kernel: bf16 MXU matmul inputs, f32 accumulation."""
    w1, b1, w2, b2, w3, b3 = params
    bf = jnp.bfloat16
    h1 = jnp.dot(x.astype(bf), w1.astype(bf),
                 preferred_element_type=jnp.float32) + b1
    h1 = jnp.maximum(h1, 0.0)
    h2 = jnp.dot(h1.astype(bf), w2.astype(bf),
                 preferred_element_type=jnp.float32) + b2
    h2 = jnp.maximum(h2, 0.0)
    return jnp.dot(h2.astype(bf), w3.astype(bf),
                   preferred_element_type=jnp.float32) + b3


def reference_forward_f32(x, params):
    w1, b1, w2, b2, w3, b3 = params
    h1 = jnp.maximum(x @ w1 + b1, 0.0)
    h2 = jnp.maximum(h1 @ w2 + b2, 0.0)
    return h2 @ w3 + b3


if __name__ == "__main__":
    key = jax.random.PRNGKey(0)

    B, in_shape, out_shape = 8, 16, 2   # small folktables-like problem
    dtype = jnp.float32

    kx, kp = jax.random.split(key)
    x = jax.random.normal(kx, (B, in_shape), dtype)
    params = init_params(kp, in_shape, out_shape, dtype)

    out = simple_net_forward(x, params)
    out = jax.block_until_ready(out)
    assert out.shape == (B, out_shape)

    # Tight check against a reference that mimics the kernel's bf16-matmul /
    # f32-accumulate path, plus a coarser sanity check against pure f32.
    # (bf16 operands change numerics vs a pure-f32 PyTorch SimpleNet; fine for
    # inference, not bit-exact.)
    ref_bf = reference_forward_bf16(x, params)
    ref_f32 = reference_forward_f32(x, params)
    assert jnp.allclose(out, ref_bf, atol=5e-3, rtol=5e-3), "mismatch vs bf16 reference"
    assert jnp.allclose(out, ref_f32, atol=5e-2, rtol=5e-2), "mismatch vs f32 reference"

    print("KERNEL_OK")
</pallas_src>

<mosaic_0001>
module attributes {stable_mosaic.version = 11 : i64} {
  func.func @mlp_kernel(%arg0: i32, %arg1: memref<8x16xf32, #tpu.memory_space<vmem>>, %arg2: memref<16x64xbf16, #tpu.memory_space<vmem>>, %arg3: memref<1x64xf32, #tpu.memory_space<vmem>>, %arg4: memref<64x32xbf16, #tpu.memory_space<vmem>>, %arg5: memref<1x32xf32, #tpu.memory_space<vmem>>, %arg6: memref<32x2xbf16, #tpu.memory_space<vmem>>, %arg7: memref<1x2xf32, #tpu.memory_space<vmem>>, %arg8: memref<8x2xf32, #tpu.memory_space<vmem>>) attributes {dimension_semantics = [#tpu.dimension_semantics<parallel>], iteration_bounds = array<i64: 1>, scalar_prefetch = 0 : i64, scratch_operands = 0 : i64, tpu.core_type = #tpu.core_type<tc>, window_params = [{transform_indices = @transform_0, window_bounds = array<i64: 8, 16>}, {pipeline_mode = #tpu.pipeline_mode<synchronous>, transform_indices = @transform_1, window_bounds = array<i64: 16, 64>}, {pipeline_mode = #tpu.pipeline_mode<synchronous>, transform_indices = @transform_2, window_bounds = array<i64: 1, 64>}, {pipeline_mode = #tpu.pipeline_mode<synchronous>, transform_indices = @transform_3, window_bounds = array<i64: 64, 32>}, {pipeline_mode = #tpu.pipeline_mode<synchronous>, transform_indices = @transform_4, window_bounds = array<i64: 1, 32>}, {pipeline_mode = #tpu.pipeline_mode<synchronous>, transform_indices = @transform_5, window_bounds = array<i64: 32, 2>}, {pipeline_mode = #tpu.pipeline_mode<synchronous>, transform_indices = @transform_6, window_bounds = array<i64: 1, 2>}, {transform_indices = @transform_7, window_bounds = array<i64: 8, 2>}]} {
    %c0 = arith.constant 0 : index
    %c0_0 = arith.constant 0 : index
    %0 = vector.load %arg1[%c0, %c0_0] : memref<8x16xf32, #tpu.memory_space<vmem>>, vector<8x16xf32>
    %1 = arith.truncf %0 : vector<8x16xf32> to vector<8x16xbf16>
    %c0_1 = arith.constant 0 : index
    %c0_2 = arith.constant 0 : index
    %2 = vector.load %arg2[%c0_1, %c0_2] : memref<16x64xbf16, #tpu.memory_space<vmem>>, vector<16x64xbf16>
    %cst = arith.constant dense<0.000000e+00> : vector<8x64xf32>
    %3 = tpu.matmul %1, %2, %cst {dimension_numbers = #tpu.dot_dimension_numbers<[1], [0], [0], [1], [0, 0, 1, 1], [], []>} : vector<8x16xbf16>, vector<16x64xbf16>, vector<8x64xf32> -> vector<8x64xf32>
    %c0_3 = arith.constant 0 : index
    %c0_4 = arith.constant 0 : index
    %4 = vector.load %arg3[%c0_3, %c0_4] : memref<1x64xf32, #tpu.memory_space<vmem>>, vector<1x64xf32>
    %5 = vector.broadcast %4 : vector<1x64xf32> to vector<8x64xf32>
    %6 = arith.addf %3, %5 : vector<8x64xf32>
    %cst_5 = arith.constant 0.000000e+00 : f32
    %7 = vector.broadcast %cst_5 : f32 to vector<8x64xf32>
    %8 = arith.maximumf %6, %7 : vector<8x64xf32>
    %9 = arith.truncf %8 : vector<8x64xf32> to vector<8x64xbf16>
    %c0_6 = arith.constant 0 : index
    %c0_7 = arith.constant 0 : index
    %10 = vector.load %arg4[%c0_6, %c0_7] : memref<64x32xbf16, #tpu.memory_space<vmem>>, vector<64x32xbf16>
    %cst_8 = arith.constant dense<0.000000e+00> : vector<8x32xf32>
    %11 = tpu.matmul %9, %10, %cst_8 {dimension_numbers = #tpu.dot_dimension_numbers<[1], [0], [0], [1], [0, 0, 1, 1], [], []>} : vector<8x64xbf16>, vector<64x32xbf16>, vector<8x32xf32> -> vector<8x32xf32>
    %c0_9 = arith.constant 0 : index
    %c0_10 = arith.constant 0 : index
    %12 = vector.load %arg5[%c0_9, %c0_10] : memref<1x32xf32, #tpu.memory_space<vmem>>, vector<1x32xf32>
    %13 = vector.broadcast %12 : vector<1x32xf32> to vector<8x32xf32>
    %14 = arith.addf %11, %13 : vector<8x32xf32>
    %cst_11 = arith.constant 0.000000e+00 : f32
    %15 = vector.broadcast %cst_11 : f32 to vector<8x32xf32>
    %16 = arith.maximumf %14, %15 : vector<8x32xf32>
    %17 = arith.truncf %16 : vector<8x32xf32> to vector<8x32xbf16>
    %c0_12 = arith.constant 0 : index
    %c0_13 = arith.constant 0 : index
    %18 = vector.load %arg6[%c0_12, %c0_13] : memref<32x2xbf16, #tpu.memory_space<vmem>>, vector<32x2xbf16>
    %cst_14 = arith.constant dense<0.000000e+00> : vector<8x2xf32>
    %19 = tpu.matmul %17, %18, %cst_14 {dimension_numbers = #tpu.dot_dimension_numbers<[1], [0], [0], [1], [0, 0, 1, 1], [], []>} : vector<8x32xbf16>, vector<32x2xbf16>, vector<8x2xf32> -> vector<8x2xf32>
    %c0_15 = arith.constant 0 : index
    %c0_16 = arith.constant 0 : index
    %20 = vector.load %arg7[%c0_15, %c0_16] : memref<1x2xf32, #tpu.memory_space<vmem>>, vector<1x2xf32>
    %21 = vector.broadcast %20 : vector<1x2xf32> to vector<8x2xf32>
    %22 = arith.addf %19, %21 : vector<8x2xf32>
    %c0_17 = arith.constant 0 : index
    %c0_18 = arith.constant 0 : index
    %23 = vector.load %arg8[%c0_17, %c0_18] : memref<8x2xf32, #tpu.memory_space<vmem>>, vector<8x2xf32>
    tpu.vector_store %arg8[%c0_17, %c0_18], %22 {strides = array<i32>} : memref<8x2xf32, #tpu.memory_space<vmem>>, vector<8x2xf32>,
    return
  }
  func.func @transform_0(%arg0: i32) -> (i32, i32) {
    %c0_i32 = arith.constant 0 : i32
    %c0_i32_0 = arith.constant 0 : i32
    return %arg0, %c0_i32 : i32, i32
  }
  func.func @transform_1(%arg0: i32) -> (i32, i32) {
    %c0_i32 = arith.constant 0 : i32
    %c0_i32_0 = arith.constant 0 : i32
    %c0_i32_1 = arith.constant 0 : i32
    return %c0_i32, %c0_i32_0 : i32, i32
  }
  func.func @transform_2(%arg0: i32) -> (i32, i32) {
    %c0_i32 = arith.constant 0 : i32
    %c0_i32_0 = arith.constant 0 : i32
    %c0_i32_1 = arith.constant 0 : i32
    return %c0_i32, %c0_i32_0 : i32, i32
  }
  func.func @transform_3(%arg0: i32) -> (i32, i32) {
    %c0_i32 = arith.constant 0 : i32
    %c0_i32_0 = arith.constant 0 : i32
    %c0_i32_1 = arith.constant 0 : i32
    return %c0_i32, %c0_i32_0 : i32, i32
  }
  func.func @transform_4(%arg0: i32) -> (i32, i32) {
    %c0_i32 = arith.constant 0 : i32
    %c0_i32_0 = arith.constant 0 : i32
    %c0_i32_1 = arith.constant 0 : i32
    return %c0_i32, %c0_i32_0 : i32, i32
  }
  func.func @transform_5(%arg0: i32) -> (i32, i32) {
    %c0_i32 = arith.constant 0 : i32
    %c0_i32_0 = arith.constant 0 : i32
    %c0_i32_1 = arith.constant 0 : i32
    return %c0_i32, %c0_i32_0 : i32, i32
  }
  func.func @transform_6(%arg0: i32) -> (i32, i32) {
    %c0_i32 = arith.constant 0 : i32
    %c0_i32_0 = arith.constant 0 : i32
    %c0_i32_1 = arith.constant 0 : i32
    return %c0_i32, %c0_i32_0 : i32, i32
  }
  func.func @transform_7(%arg0: i32) -> (i32, i32) {
    %c0_i32 = arith.constant 0 : i32
    %c0_i32_0 = arith.constant 0 : i32
    return %arg0, %c0_i32 : i32, i32
  }
}

</mosaic_0001>

<llo_original>
// kernel: simple_net_forward.1
$region0: #{simple_net_forward.1}
  #allocation0 [shape = 'u32[]', space=smem, size = 0x4, offset = 0x4, fixed_abs, tag = 'smem constant byte address 0x4 - core index']
  #allocation1 [shape = 'u32[72,128]{1,0:T(1,128)}', space=vmem, size = 0x9000, scoped, tag = 'internal scratch']
  %s0 = inlined_call_operand.vmem [shape: f32[8,16], index: 0, kind: input, shape index: {}]
  %s1 = inlined_call_operand.vmem [shape: bf16[16,64], index: 1, kind: input, shape index: {}]
  %s2 = inlined_call_operand.vmem [shape: f32[1,64], index: 2, kind: input, shape index: {}]
  %s3 = inlined_call_operand.vmem [shape: bf16[64,32], index: 3, kind: input, shape index: {}]
  %s4 = inlined_call_operand.vmem [shape: f32[1,32], index: 4, kind: input, shape index: {}]
  %s5 = inlined_call_operand.vmem [shape: bf16[32,2], index: 5, kind: input, shape index: {}]
  %s6 = inlined_call_operand.vmem [shape: f32[1,2], index: 6, kind: input, shape index: {}]
  %s7 = inlined_call_operand.vmem [shape: f32[8,2], index: 7, kind: output, shape index: {}]
  %s8 = sld [smem:[#allocation0]]
  $region38: #{simple_net_forward.1} parent=0
    _
  %s10 = ssub.s32 1, %s8
  %s11 = scalar_select 0, %s10, %s8
  // Predicated region
  $region2: #{simple_net_forward.1} parent=0 // pred_check
    _
  $region3: #{simple_net_forward.1} parent=0 // pred_check_branch
    %13 = sbr.rel (0) target = $region5
  $region4: #{simple_net_forward.1} parent=0 // pred_region
    _
  $region5: #{simple_net_forward.1} parent=0 // pred_fallthru
    _
  // Predicated region
  $region6: #{simple_net_forward.1} parent=0 // pred_check
    _
  $region7: #{simple_net_forward.1} parent=0 // pred_check_branch
    %15 = sbr.rel (0) target = $region9
  $region8: #{simple_net_forward.1} parent=0 // pred_region
    _
  $region9: #{simple_net_forward.1} parent=0 // pred_fallthru
    _
  // Predicated region
  $region10: #{simple_net_forward.1} parent=0 // pred_check
    _
  $region11: #{simple_net_forward.1} parent=0 // pred_check_branch
    %17 = sbr.rel (0) target = $region13
  $region12: #{simple_net_forward.1} parent=0 // pred_region
    _
  $region13: #{simple_net_forward.1} parent=0 // pred_fallthru
    _
  // Predicated region
  $region14: #{simple_net_forward.1} parent=0 // pred_check
    _
  $region15: #{simple_net_forward.1} parent=0 // pred_check_branch
    %19 = sbr.rel (0) target = $region17
  $region16: #{simple_net_forward.1} parent=0 // pred_region
    _
  $region17: #{simple_net_forward.1} parent=0 // pred_fallthru
    _
  // Predicated region
  $region18: #{simple_net_forward.1} parent=0 // pred_check
    _
  $region19: #{simple_net_forward.1} parent=0 // pred_check_branch
    %21 = sbr.rel (0) target = $region21
  $region20: #{simple_net_forward.1} parent=0 // pred_region
    _
  $region21: #{simple_net_forward.1} parent=0 // pred_fallthru
    _
  // Predicated region
  $region22: #{simple_net_forward.1} parent=0 // pred_check
    _
  $region23: #{simple_net_forward.1} parent=0 // pred_check_branch
    %23 = sbr.rel (0) target = $region25
  $region24: #{simple_net_forward.1} parent=0 // pred_region
    _
  $region25: #{simple_net_forward.1} parent=0 // pred_fallthru
    _
  // Predicated region
  $region26: #{simple_net_forward.1} parent=0 // pred_check
    _
  $region27: #{simple_net_forward.1} parent=0 // pred_check_branch
    %25 = sbr.rel (0) target = $region29
  $region28: #{simple_net_forward.1} parent=0 // pred_region
    _
  $region29: #{simple_net_forward.1} parent=0 // pred_fallthru
    _
  %v27 = vld [vmem:[%s0] sm:$0xff]
  %v28 = vpack.c.bf16 %v27, %v27
  %v29 = vld [vmem:[%s1] sm:$0xf]
  %v30 = vld [vmem:[%s1 + $0x4] sm:$0xf]
  %v31 = vld [vmem:[%s2] sm:$0x1]
  %v33 = vperm.slane %v31, 0
  %v37 = vunpack.c.l.b16 %v29
  %v38 = vunpack.c.l.b16 %v30
  %v39 = vpack.c.b16 %v38, %v37
  %vm41 = vcmask 130048
  %v43 = vsel %vm41, %v28, 0
  %45 = vmatpush.bf16.msra.mxu0 0
  %46 = vmatpush.bf16.msra.mxu0 0
  %47 = vmatpush.bf16.msra.mxu0 0
  %48 = vmatpush.bf16.msra.mxu0 0
  %49 = vmatpush.bf16.msra.mxu0 0
  %50 = vmatpush.bf16.msra.mxu0 0
  %51 = vmatpush.bf16.msra.mxu0 0
  %52 = vmatpush.bf16.msra.mxu0 %v39
  %53 = vmatmul.bf16.gmra.mxu0 %v43
  %v54 = vpop.f32.mrf.mxu0
  %v55 = vadd.f32 %v33, %v54
  %v56 = vpop.f32.mrf.mxu0
  %57 = vdwg.mxu0
  %v58 = vmax.f32 %v55, 0.0
  %v59 = vpack.c.bf16 %v58, %v58
  %v60 = vld [vmem:[%s3] sm:$0xf]
  %v61 = vld [vmem:[%s3 + $0x4] sm:$0xf]
  %v62 = vld [vmem:[%s3 + $0x8] sm:$0xf]
  %v63 = vld [vmem:[%s3 + $0xc] sm:$0xf]
  %v64 = vld [vmem:[%s3 + $0x10] sm:$0xf]
  %v65 = vld [vmem:[%s3 + $0x14] sm:$0xf]
  %v66 = vld [vmem:[%s3 + $0x18] sm:$0xf]
  %v67 = vld [vmem:[%s3 + $0x1c] sm:$0xf]
  %v68 = vld [vmem:[%s4] sm:$0x1]
  %v70 = vperm.slane %v68, 0
  %v80 = vunpack.c.l.b16 %v60
  %v81 = vunpack.c.l.b16 %v61
  %v82 = vunpack.c.l.b16 %v62
  %v83 = vunpack.c.l.b16 %v63
  %v84 = vunpack.c.l.b16 %v64
  %v85 = vunpack.c.l.b16 %v65
  %v86 = vunpack.c.l.b16 %v66
  %v87 = vunpack.c.l.b16 %v67
  %v88 = vpack.c.b16 %v81, %v80
  %v89 = vpack.c.b16 %v83, %v82
  %v90 = vpack.c.b16 %v85, %v84
  %v91 = vpack.c.b16 %v87, %v86
  %vm96 = vcmask 523264
  %v98 = vsel %vm96, %v59, 0
  %100 = vmatpush.bf16.msra.mxu0 0
  %101 = vmatpush.bf16.msra.mxu0 0
  %102 = vmatpush.bf16.msra.mxu0 0
  %103 = vmatpush.bf16.msra.mxu0 0
  %104 = vmatpush.bf16.msra.mxu0 %v91
  %105 = vmatpush.bf16.msra.mxu0 %v90
  %106 = vmatpush.bf16.msra.mxu0 %v89
  %107 = vmatpush.bf16.msra.mxu0 %v88
  %108 = vmatmul.bf16.gmra.mxu0 %v98
  %v109 = vpop.f32.mrf.mxu0
  %v110 = vadd.f32 %v70, %v109
  %v111 = vpop.f32.mrf.mxu0
  %112 = vdwg.mxu0
  %v113 = vmax.f32 %v110, 0.0
  %v114 = vpack.c.bf16 %v113, %v113
  %v115 = vld [vmem:[%s5] sm:$0xf]
  %v116 = vld [vmem:[%s5 + $0x4] sm:$0xf]
  %v117 = vld [vmem:[%s5 + $0x8] sm:$0xf]
  %v118 = vld [vmem:[%s5 + $0xc] sm:$0xf]
  %v119 = vld [vmem:[%s6] sm:$0x1]
  %v121 = vperm.slane %v119, 0
  %v127 = vunpack.c.l.b16 %v115
  %v128 = vunpack.c.l.b16 %v116
  %v129 = vunpack.c.l.b16 %v117
  %v130 = vunpack.c.l.b16 %v118
  %v131 = vpack.c.b16 %v128, %v127
  %v132 = vpack.c.b16 %v130, %v129
  %vm135 = vcmask 261120
  %v137 = vsel %vm135, %v114, 0
  %139 = vmatpush.bf16.msra.mxu0 0
  %140 = vmatpush.bf16.msra.mxu0 0
  %141 = vmatpush.bf16.msra.mxu0 0
  %142 = vmatpush.bf16.msra.mxu0 0
  %143 = vmatpush.bf16.msra.mxu0 0
  %144 = vmatpush.bf16.msra.mxu0 0
  %145 = vmatpush.bf16.msra.mxu0 %v132
  %146 = vmatpush.bf16.msra.mxu0 %v131
  %147 = vmatmul.bf16.gmra.mxu0 %v137
  %v148 = vpop.f32.mrf.mxu0
  %v149 = vadd.f32 %v121, %v148
  %v150 = vpop.f32.mrf.mxu0
  %151 = vdwg.mxu0
  %vm152 = vcmask 15360
  %153 = vst.msk [vmem:[%s7] sm:$0xff] %vm152, %v149
  // Predicated region
  $region30: #{simple_net_forward.1} parent=0 // pred_check
    _
  $region31: #{simple_net_forward.1} parent=0 // pred_check_branch
    %155 = sbr.rel (0) target = $region33
  $region32: #{simple_net_forward.1} parent=0 // pred_region
    _
  $region33: #{simple_net_forward.1} parent=0 // pred_fallthru
    _
  // Predicated region
  $region34: #{simple_net_forward.1} parent=0 // pred_check
    _
  $region35: #{simple_net_forward.1} parent=0 // pred_check_branch
    %157 = sbr.rel (0) target = $region37
  $region36: #{simple_net_forward.1} parent=0 // pred_region
    _
  $region37: #{simple_net_forward.1} parent=0 // pred_fallthru
    _

</llo_original>
